<compile_context>
chip_gen: v7x
topology: tpu7x:2x2x1
jax: 0.10.0
libtpu: 0.0.40
codegen_flags: <defaults>
</compile_context>

<pallas_src>
import math

import jax
import jax.numpy as jnp
from jax.experimental import pallas as pl
from jax.experimental.pallas import tpu as pltpu


def build_pe_table(d_model: int, max_len: int, dtype=jnp.float32) -> jnp.ndarray:
    """Sinusoidal positional-encoding table; identical math to the torch module."""
    assert d_model % 2 == 0, "sinusoidal PE requires an even d_model (same assumption as the torch module)"
    position = jnp.arange(0, max_len, dtype=jnp.float32)[:, None]               # (max_len, 1)
    div_term = jnp.exp(
        jnp.arange(0, d_model, 2, dtype=jnp.float32) * (-math.log(10000.0) / d_model)
    )                                                                            # (d_model//2,)
    ang = position * div_term                                                    # (max_len, d_model//2)
    pe = jnp.zeros((max_len, d_model), dtype=jnp.float32)
    pe = pe.at[:, 0::2].set(jnp.sin(ang))
    pe = pe.at[:, 1::2].set(jnp.cos(ang))
    return pe.astype(dtype)                                                      # cast once, at build time


def _pe_add_kernel(x_ref, pe_ref, o_ref):
    # x_ref / o_ref: (tB, tS, D); pe_ref: (tS, D) — broadcast over the leading batch tile.
    o_ref[...] = x_ref[...] + pe_ref[...]


def _vmem_capacity_bytes() -> int:
    """Physical VMEM per TensorCore; conservative fallback if the query is unavailable."""
    try:
        cap = getattr(pltpu.get_tpu_info(), "vmem_capacity_bytes", None)
        if cap:
            return int(cap)
    except Exception:
        pass
    return 64 << 20                                   # v7x per-TC VMEM (smallest of the targets)


def _pick_tiles(B: int, S: int, D: int, itemsize: int, block_budget_bytes: int):
    """Largest sublane-aligned row tile under the block budget; fold batch when
    a single full-S tile is still far under budget (avoids tiny, overhead-bound DMAs)."""
    sublane = max(8, 32 // itemsize)                  # 8 for f32, 16 for bf16, 32 for int8
    row_bytes = itemsize * D
    budget_rows = max(sublane, block_budget_bytes // max(1, row_bytes))
    budget_rows = (budget_rows // sublane) * sublane
    s_aligned = pl.cdiv(S, sublane) * sublane         # legal minimum block extent for small S
    tS = min(s_aligned, budget_rows)
    n_s = pl.cdiv(S, tS)

    tB = 1
    if n_s == 1:                                      # whole sequence fits: fold batch into the block
        tB = max(1, min(B, block_budget_bytes // max(1, tS * row_bytes)))
    n_b = pl.cdiv(B, tB)
    return tB, tS, n_s, n_b


def positional_encoding(x: jnp.ndarray, pe_table: jnp.ndarray) -> jnp.ndarray:
    """x: (B, S, D); pe_table: (max_len, D).  Returns x + pe_table[:S] (broadcast over B)."""
    B, S, D = x.shape
    max_len, d_model = pe_table.shape
    assert S <= max_len, "sequence length exceeds max_len"
    assert D == d_model, "d_model mismatch"

    if pe_table.dtype != x.dtype:                     # no-op when the table was built in x's dtype
        pe_table = pe_table.astype(x.dtype)

    itemsize = jnp.dtype(x.dtype).itemsize
    vmem_cap = _vmem_capacity_bytes()
    # Generation-aware block budget: ~4 MiB on 64 MiB VMEM (v7x), ~12 MiB on 128 MiB (v5e/v6e).
    block_budget = (4 << 20) if vmem_cap <= (64 << 20) else (12 << 20)

    tB, tS, n_s, n_b = _pick_tiles(B, S, D, itemsize, block_budget)

    # TODO(synk): if D is not a multiple of 128, masked partial stores slow the
    # write path; callers with such odd d_model should pad the feature axis.

    blk_bytes = tB * tS * D * itemsize
    pe_bytes = tS * D * itemsize
    # x and out double-buffered (2 each) + pe double-buffered + headroom.
    need = 4 * blk_bytes + 2 * pe_bytes + (4 << 20)
    vmem_limit = int(min(vmem_cap * 3 // 4, max(32 << 20, need)))

    return pl.pallas_call(
        _pe_add_kernel,
        out_shape=jax.ShapeDtypeStruct((B, S, D), x.dtype),
        grid=(n_s, n_b),                              # outer: row tiles, inner: batch (pe revisited)
        in_specs=[
            # (tB, tS, D) tile of x.
            pl.BlockSpec((tB, tS, D), lambda s, b: (b, s, 0)),
            # (tS, D) tile of the PE table: index depends only on the row-tile axis,
            # so consecutive batch steps reuse the resident block (DMA skipped).
            pl.BlockSpec((tS, D), lambda s, b: (s, 0)),
        ],
        out_specs=pl.BlockSpec((tB, tS, D), lambda s, b: (b, s, 0)),
        compiler_params=pltpu.CompilerParams(
            dimension_semantics=("parallel", "arbitrary"),
            vmem_limit_bytes=vmem_limit,
        ),
    )(x, pe_table)


if __name__ == "__main__":
    # Small shapes consistent with the module's forward: (batch, seq, d_model).
    batch, seq, d_model, max_len = 2, 8, 128, 48

    key = jax.random.PRNGKey(0)
    x = jax.random.normal(key, (batch, seq, d_model), dtype=jnp.float32)

    pe_table = build_pe_table(d_model=d_model, max_len=max_len, dtype=x.dtype)

    # Reference (plain JAX, same math as the torch forward).
    ref = x + pe_table[None, :seq, :]

    out = positional_encoding(x, pe_table)
    out = jax.block_until_ready(out)

    assert out.shape == (batch, seq, d_model) and out.dtype == jnp.float32
    assert jnp.allclose(out, ref, atol=1e-6, rtol=1e-6)

    print("KERNEL_OK")
</pallas_src>

<mosaic_0001>
module attributes {stable_mosaic.version = 11 : i64} {
  func.func @_pe_add_kernel(%arg0: i32, %arg1: i32, %arg2: memref<2x8x128xf32, #tpu.memory_space<vmem>>, %arg3: memref<8x128xf32, #tpu.memory_space<vmem>>, %arg4: memref<2x8x128xf32, #tpu.memory_space<vmem>>) attributes {dimension_semantics = [#tpu.dimension_semantics<parallel>, #tpu.dimension_semantics<arbitrary>], iteration_bounds = array<i64: 1, 1>, scalar_prefetch = 0 : i64, scratch_operands = 0 : i64, tpu.core_type = #tpu.core_type<tc>, window_params = [{transform_indices = @transform_0, window_bounds = array<i64: 2, 8, 128>}, {transform_indices = @transform_1, window_bounds = array<i64: 8, 128>}, {transform_indices = @transform_2, window_bounds = array<i64: 2, 8, 128>}]} {
    %c0 = arith.constant 0 : index
    %c0_0 = arith.constant 0 : index
    %c0_1 = arith.constant 0 : index
    %0 = vector.load %arg2[%c0, %c0_0, %c0_1] : memref<2x8x128xf32, #tpu.memory_space<vmem>>, vector<2x8x128xf32>
    %c0_2 = arith.constant 0 : index
    %c0_3 = arith.constant 0 : index
    %1 = vector.load %arg3[%c0_2, %c0_3] : memref<8x128xf32, #tpu.memory_space<vmem>>, vector<8x128xf32>
    %2 = vector.shape_cast %1 : vector<8x128xf32> to vector<1x8x128xf32>
    %3 = vector.broadcast %2 : vector<1x8x128xf32> to vector<2x8x128xf32>
    %4 = arith.addf %0, %3 : vector<2x8x128xf32>
    %c0_4 = arith.constant 0 : index
    %c0_5 = arith.constant 0 : index
    %c0_6 = arith.constant 0 : index
    %5 = vector.load %arg4[%c0_4, %c0_5, %c0_6] : memref<2x8x128xf32, #tpu.memory_space<vmem>>, vector<2x8x128xf32>
    tpu.vector_store %arg4[%c0_4, %c0_5, %c0_6], %4 {strides = array<i32>} : memref<2x8x128xf32, #tpu.memory_space<vmem>>, vector<2x8x128xf32>,
    return
  }
  func.func @transform_0(%arg0: i32, %arg1: i32) -> (i32, i32, i32) {
    %c0_i32 = arith.constant 0 : i32
    %c0_i32_0 = arith.constant 0 : i32
    return %arg1, %arg0, %c0_i32 : i32, i32, i32
  }
  func.func @transform_1(%arg0: i32, %arg1: i32) -> (i32, i32) {
    %c0_i32 = arith.constant 0 : i32
    %c0_i32_0 = arith.constant 0 : i32
    return %arg0, %c0_i32 : i32, i32
  }
  func.func @transform_2(%arg0: i32, %arg1: i32) -> (i32, i32, i32) {
    %c0_i32 = arith.constant 0 : i32
    %c0_i32_0 = arith.constant 0 : i32
    return %arg1, %arg0, %c0_i32 : i32, i32, i32
  }
}

</mosaic_0001>

<llo_original>
// kernel: tpu_custom_call.1
$region0: #{tpu_custom_call.1}
  #allocation0 [shape = 'u32[]', space=smem, size = 0x4, offset = 0x4, fixed_abs, tag = 'smem constant byte address 0x4 - core index']
  #allocation1 [shape = 'u32[144,128]{1,0:T(1,128)}', space=vmem, size = 0x12000, scoped, tag = 'internal scratch']
  %s0 = inlined_call_operand.hbm [shape: f32[2,8,128], index: 0, kind: input, shape index: {}]
  %s1 = inlined_call_operand.hbm [shape: f32[48,128], index: 1, kind: input, shape index: {}]
  %s2 = inlined_call_operand.hbm [shape: f32[2,8,128], index: 2, kind: output, shape index: {}]
  %s3 = sld [smem:[#allocation0]]
  $region26: #{tpu_custom_call.1} parent=0
    _
  %s5 = ssub.s32 1, %s3
  %s6 = scalar_select 0, %s5, %s3
  $region1: #{tpu_custom_call.1} parent=0
    #allocation2 [shape = 'u8[8192]{0}', space=vmem, size = 0x2000, scoped, tag = 'input window, operand 0, single buffered']
    #allocation3 [shape = 's32[1]{0}', space=sflag, size = 0x4, scoped, tag = 'scoped memory for tpu_custom_call.1']
    #allocation4 [shape = 's32[1]{0}', space=sflag, size = 0x4, scoped, tag = 'scoped memory for tpu_custom_call.1']
    #allocation5 [shape = 'u8[4096]{0}', space=vmem, size = 0x1000, scoped, tag = 'input window, operand 1, single buffered']
    #allocation6 [shape = 's32[1]{0}', space=sflag, size = 0x4, scoped, tag = 'scoped memory for tpu_custom_call.1']
    #allocation7 [shape = 'u8[8192]{0}', space=vmem, size = 0x2000, scoped, tag = 'output window, operand 0, single buffered']
    %7 = vsyncpa [#allocation3], 0
    %8 = vsyncpa [#allocation6], 0
    %9 = vsyncpa [#allocation4], 0
    // Predicated region
    $region2: #{tpu_custom_call.1} parent=1 // pred_check
      _
    $region3: #{tpu_custom_call.1} parent=1 // pred_check_branch
      %11 = sbr.rel (0) target = $region5
    $region4: #{tpu_custom_call.1} parent=1 // pred_region
      %s13 = ssub.s32 256, 256
      %14 = vsyncadd [#allocation3], %s13
      %s15 = sshll.u32 [#allocation2], 4
      %s16 = int_to_ptr.vmem [resolvable:$true] %s15
      %21 = dma.hbm_to_vmem [thread:$0]  %s0, 256, %s16, [#allocation3], 128, 128, 8
    $region5: #{tpu_custom_call.1} parent=1 // pred_fallthru
      _
    // Predicated region
    $region6: #{tpu_custom_call.1} parent=1 // pred_check
      _
    $region7: #{tpu_custom_call.1} parent=1 // pred_check_branch
      %23 = sbr.rel (0) target = $region9
    $region8: #{tpu_custom_call.1} parent=1 // pred_region
      %s25 = ssub.s32 128, 128
      %26 = vsyncadd [#allocation6], %s25
      %s28 = sshll.u32 [#allocation5], 4
      %s29 = int_to_ptr.vmem [resolvable:$true] %s28
      %31 = dma.hbm_to_vmem [thread:$0]  %s1, 128, %s29, [#allocation6]
    $region9: #{tpu_custom_call.1} parent=1 // pred_fallthru
      _
    // Predicated region
    $region10: #{tpu_custom_call.1} parent=1 // pred_check
      _
    $region11: #{tpu_custom_call.1} parent=1 // pred_check_branch
      %33 = sbr.rel (0) target = $region13
    $region12: #{tpu_custom_call.1} parent=1 // pred_region
      %34 = dma.done [#allocation3], 256
    $region13: #{tpu_custom_call.1} parent=1 // pred_fallthru
      _
    // Predicated region
    $region14: #{tpu_custom_call.1} parent=1 // pred_check
      _
    $region15: #{tpu_custom_call.1} parent=1 // pred_check_branch
      %36 = sbr.rel (0) target = $region17
    $region16: #{tpu_custom_call.1} parent=1 // pred_region
      %37 = dma.done [#allocation6], 128
    $region17: #{tpu_custom_call.1} parent=1 // pred_fallthru
      _
    %v38 = vld [vmem:[#allocation2] sm:$0xff]
    %v39 = vld [vmem:[#allocation2 + $0x8] sm:$0xff]
    %v40 = vld [vmem:[#allocation5] sm:$0xff]
    %v41 = vadd.f32 %v38, %v40
    %v42 = vadd.f32 %v39, %v40
    %43 = vst [vmem:[#allocation7] sm:$0xff] %v41
    %44 = vst [vmem:[#allocation7 + $0x8] sm:$0xff] %v42
    // Predicated region
    $region18: #{tpu_custom_call.1} parent=1 // pred_check
      _
    $region19: #{tpu_custom_call.1} parent=1 // pred_check_branch
      %46 = sbr.rel (0) target = $region21
    $region20: #{tpu_custom_call.1} parent=1 // pred_region
      %s48 = ssub.s32 256, 256
      %49 = vsyncadd [#allocation4], %s48
      %s50 = sshll.u32 [#allocation7], 4
      %s51 = int_to_ptr.vmem [resolvable:$true] %s50
      %56 = dma.vmem_to_hbm [thread:$0]  %s51, 256, %s2, [#allocation4], 128, 128, 8
    $region21: #{tpu_custom_call.1} parent=1 // pred_fallthru
      _
    // Predicated region
    $region22: #{tpu_custom_call.1} parent=1 // pred_check
      _
    $region23: #{tpu_custom_call.1} parent=1 // pred_check_branch
      %58 = sbr.rel (0) target = $region25
    $region24: #{tpu_custom_call.1} parent=1 // pred_region
      %59 = dma.done [#allocation4], 256
    $region25: #{tpu_custom_call.1} parent=1 // pred_fallthru
      _
    %60 = vsyncpa [#allocation3], 1
    %61 = vsyncpa [#allocation6], 1
    %62 = vsyncpa [#allocation4], 1

</llo_original>
